<compile_context>
chip_gen: v7x
topology: tpu7x:2x2x1
jax: 0.10.0
libtpu: 0.0.40
codegen_flags: <defaults>
</compile_context>

<pallas_src>
import functools
import math

import jax
import jax.numpy as jnp
from jax import lax
from jax.experimental import pallas as pl
from jax.experimental.pallas import tpu as pltpu

_LANES = 128
_SUBLANES = 8
_NCORES = 2                        # "parallel" axis: both TCs on v7x, serial elsewhere
_BYTES_PER_BUF = 4 * 1024 * 1024   # ~4 MiB per input per pipeline buffer


def _round_up(x: int, m: int) -> int:
    return ((x + m - 1) // m) * m


def _sublane_align(dtype) -> int:
    # Minimum sublane multiple for the packed dtype: f32->8, bf16->16, int8->32.
    return {4: 8, 2: 16, 1: 32}.get(jnp.dtype(dtype).itemsize, 8)


def _iou_kernel(pred_ref, targ_ref, out_ref, *,
                threshold_logit, blocks_per_core, block_rows, valid_rows):
    """Accumulate per-lane partials of I = sum(pb*t) and S = sum(pb+t).

    out_ref block: (1, 2, 8, 128) — slot 0 holds intersection partials, slot 1
    holds (pred_sum + target_sum) partials. The block index depends only on the
    parallel (core) axis, so it stays resident across the inner axis.
    """
    c = pl.program_id(0)
    i = pl.program_id(1)

    @pl.when(i == 0)
    def _():
        out_ref[...] = jnp.zeros(out_ref.shape, out_ref.dtype)

    # Un-clamped global block index; the BlockSpec index_map clamps the DMA to
    # stay in-bounds, but validity is judged against the raw index so clamped
    # duplicate blocks (and the ragged edge block) contribute exactly zero.
    gidx = c * blocks_per_core + i
    remaining = valid_rows - gidx * block_rows
    full = remaining >= block_rows

    def accumulate(pb, t):
        inter = pb * t          # intersection terms
        both = pb + t           # pred_sum + target_sum terms (union = S - I)
        # Fold rows into (8,128) vreg-shaped accumulators with pure VALU adds;
        # cross-sublane/lane reduction is deferred to the JAX wrapper.
        out_ref[0, 0] += jnp.sum(
            inter.reshape(block_rows // _SUBLANES, _SUBLANES, _LANES), axis=0)
        out_ref[0, 1] += jnp.sum(
            both.reshape(block_rows // _SUBLANES, _SUBLANES, _LANES), axis=0)

    # Fast path: fully valid block. Compare in the NATIVE dtype (no upcast
    # before the threshold), cast only the 0/1 mask and target for the sums.
    @pl.when(full)
    def _():
        pb = (pred_ref[...] > threshold_logit).astype(jnp.float32)
        t = targ_ref[...].astype(jnp.float32)
        accumulate(pb, t)

    # Slow path (at most NCORES blocks total): mask rows >= remaining so the
    # unspecified edge-padding / duplicated data contributes nothing.
    @pl.when(jnp.logical_not(full))
    def _():
        nvalid = jnp.clip(remaining, 0, block_rows)
        row_ids = lax.broadcasted_iota(jnp.int32, (block_rows, _LANES), 0)
        mask = row_ids < nvalid
        pb = jnp.where(mask,
                       (pred_ref[...] > threshold_logit).astype(jnp.float32),
                       0.0)
        t = jnp.where(mask, targ_ref[...].astype(jnp.float32), 0.0)
        accumulate(pb, t)


def iou_score(pred, target, threshold: float = 0.5, smooth: float = 1e-6):
    """Pallas TPU IoU score. pred/target: matching-size arrays (e.g. NCHW)."""
    total = pred.size
    assert target.size == total

    # sigmoid(x) > thr  <=>  x > log(thr / (1 - thr)); assumes 0 < thr < 1.
    thr_logit = float(math.log(threshold / (1.0 - threshold)))

    # Contiguous ravel is a metadata-only reshape (no HBM copy).
    pred_flat = pred.reshape(-1)
    targ_flat = target.reshape(-1)

    rem = total % _LANES
    main = total - rem
    rows = main // _LANES

    # Tail (< 128 elements) reduced directly in the wrapper (tiny).
    inter_tail = jnp.float32(0.0)
    both_tail = jnp.float32(0.0)
    if rem:
        p_t = pred_flat[main:].astype(jnp.float32)
        t_t = targ_flat[main:].astype(jnp.float32)
        pb_t = (p_t > thr_logit).astype(jnp.float32)
        inter_tail = jnp.sum(pb_t * t_t)
        both_tail = jnp.sum(pb_t) + jnp.sum(t_t)

    if rows == 0:
        intersection = inter_tail
        both = both_tail
    else:
        if rem:
            # TODO(synk): this prefix slice materializes a copy of the bulk; it
            # is only hit when total % 128 != 0 (rare for segmentation shapes).
            pred_bulk = lax.slice(pred_flat, (0,), (main,))
            targ_bulk = lax.slice(targ_flat, (0,), (main,))
        else:
            pred_bulk = pred_flat
            targ_bulk = targ_flat
        pred2d = pred_bulk.reshape(rows, _LANES)
        targ2d = targ_bulk.reshape(rows, _LANES)

        p_item = jnp.dtype(pred.dtype).itemsize
        t_item = jnp.dtype(target.dtype).itemsize
        itemsize = max(p_item, t_item)
        align = max(_sublane_align(pred.dtype), _sublane_align(target.dtype),
                    _SUBLANES)

        # Byte-budget block: ~4 MiB per input per buffer, rounded to the
        # packed-dtype sublane multiple; capped for small inputs.
        budget_rows = max(align,
                          (_BYTES_PER_BUF // (_LANES * itemsize)) // align * align)
        block_rows = min(budget_rows, _round_up(pl.cdiv(rows, _NCORES), align))
        nblocks = pl.cdiv(rows, block_rows)
        blocks_per_core = pl.cdiv(nblocks, _NCORES)

        kernel = functools.partial(
            _iou_kernel,
            threshold_logit=thr_logit,
            blocks_per_core=blocks_per_core,
            block_rows=block_rows,
            valid_rows=rows)

        def in_map(c, i):
            # Clamp so the DMA never walks past the last real block; validity
            # of clamped duplicates is handled in-kernel via the row mask.
            return (jnp.minimum(c * blocks_per_core + i, nblocks - 1), 0)

        bytes_accessed = rows * _LANES * (p_item + t_item) \
            + _NCORES * 2 * _SUBLANES * _LANES * 4

        partials = pl.pallas_call(
            kernel,
            out_shape=jax.ShapeDtypeStruct((_NCORES, 2, _SUBLANES, _LANES),
                                           jnp.float32),
            grid=(_NCORES, blocks_per_core),
            in_specs=[
                pl.BlockSpec((block_rows, _LANES), in_map),
                pl.BlockSpec((block_rows, _LANES), in_map),
            ],
            out_specs=pl.BlockSpec((1, 2, _SUBLANES, _LANES),
                                   lambda c, i: (c, 0, 0, 0)),
            compiler_params=pltpu.CompilerParams(
                dimension_semantics=("parallel", "arbitrary"),
                vmem_limit_bytes=32 * 1024 * 1024,
            ),
            cost_estimate=pl.CostEstimate(
                flops=6 * rows * _LANES,
                transcendentals=0,
                bytes_accessed=int(bytes_accessed),
            ),
        )(pred2d, targ2d)

        intersection = jnp.sum(partials[:, 0]) + inter_tail
        both = jnp.sum(partials[:, 1]) + both_tail

    union = both - intersection
    return ((intersection + smooth) / (union + smooth)).astype(jnp.float32)


def _iou_ref(pred, target, threshold=0.5, smooth=1e-6):
    p = jax.nn.sigmoid(pred.astype(jnp.float32))
    pb = (p > threshold).astype(jnp.float32)
    t = target.astype(jnp.float32)
    inter = jnp.sum(pb.ravel() * t.ravel())
    union = jnp.sum(pb) + jnp.sum(t) - inter
    return (inter + smooth) / (union + smooth)


if __name__ == "__main__":
    key = jax.random.PRNGKey(0)
    k1, k2 = jax.random.split(key)

    # Small NCHW inputs: batch=2, channels=4, spatial=16x16.
    pred = jax.random.normal(k1, (2, 4, 16, 16), dtype=jnp.float32)
    target = (jax.random.uniform(k2, (2, 4, 16, 16)) > 0.5).astype(jnp.float32)

    iou = iou_score(pred, target)
    jax.block_until_ready(iou)

    ref = _iou_ref(pred, target)
    assert jnp.allclose(iou, ref, atol=1e-5, rtol=1e-5), (iou, ref)

    print("KERNEL_OK")
</pallas_src>

<mosaic_0001>
module attributes {stable_mosaic.version = 11 : i64} {
  func.func @_iou_kernel(%arg0: i32, %arg1: i32, %arg2: memref<8x128xf32, #tpu.memory_space<vmem>>, %arg3: memref<8x128xf32, #tpu.memory_space<vmem>>, %arg4: memref<1x2x8x128xf32, #tpu.memory_space<vmem>>) attributes {dimension_semantics = [#tpu.dimension_semantics<parallel>, #tpu.dimension_semantics<arbitrary>], iteration_bounds = array<i64: 2, 1>, scalar_prefetch = 0 : i64, scratch_operands = 0 : i64, tpu.core_type = #tpu.core_type<tc>, window_params = [{transform_indices = @transform_0, window_bounds = array<i64: 8, 128>}, {transform_indices = @transform_1, window_bounds = array<i64: 8, 128>}, {transform_indices = @transform_2, window_bounds = array<i64: 1, 2, 8, 128>}]} {
    %c0_i32 = arith.constant 0 : i32
    %0 = arith.cmpi eq, %arg1, %c0_i32 : i32
    %1 = arith.extui %0 : i1 to i32
    %c0_i32_0 = arith.constant 0 : i32
    %2 = arith.cmpi ne, %1, %c0_i32_0 : i32
    scf.if %2 {
      %cst = arith.constant 0.000000e+00 : f32
      %13 = vector.broadcast %cst : f32 to vector<1x2x8x128xf32>
      %c0 = arith.constant 0 : index
      %c0_4 = arith.constant 0 : index
      %c0_5 = arith.constant 0 : index
      %c0_6 = arith.constant 0 : index
      %14 = vector.load %arg4[%c0, %c0_4, %c0_5, %c0_6] : memref<1x2x8x128xf32, #tpu.memory_space<vmem>>, vector<1x2x8x128xf32>
      tpu.vector_store %arg4[%c0, %c0_4, %c0_5, %c0_6], %13 {strides = array<i32>} : memref<1x2x8x128xf32, #tpu.memory_space<vmem>>, vector<1x2x8x128xf32>,
    } else {
    }
    %c1_i32 = arith.constant 1 : i32
    %3 = arith.muli %arg0, %c1_i32 : i32
    %4 = arith.addi %3, %arg1 : i32
    %c8_i32 = arith.constant 8 : i32
    %5 = arith.muli %4, %c8_i32 : i32
    %c16_i32 = arith.constant 16 : i32
    %6 = arith.subi %c16_i32, %5 : i32
    %c8_i32_1 = arith.constant 8 : i32
    %7 = arith.cmpi sge, %6, %c8_i32_1 : i32
    %8 = arith.extui %7 : i1 to i32
    %c0_i32_2 = arith.constant 0 : i32
    %9 = arith.cmpi ne, %8, %c0_i32_2 : i32
    scf.if %9 {
      %c0 = arith.constant 0 : index
      %c0_4 = arith.constant 0 : index
      %13 = vector.load %arg2[%c0, %c0_4] : memref<8x128xf32, #tpu.memory_space<vmem>>, vector<8x128xf32>
      %cst = arith.constant 0.000000e+00 : f32
      %14 = vector.broadcast %cst : f32 to vector<8x128xf32>
      %15 = arith.cmpf ogt, %13, %14 : vector<8x128xf32>
      %16 = arith.extui %15 : vector<8x128xi1> to vector<8x128xi32>
      %17 = arith.sitofp %16 : vector<8x128xi32> to vector<8x128xf32>
      %c0_5 = arith.constant 0 : index
      %c0_6 = arith.constant 0 : index
      %18 = vector.load %arg3[%c0_5, %c0_6] : memref<8x128xf32, #tpu.memory_space<vmem>>, vector<8x128xf32>
      %19 = arith.mulf %17, %18 : vector<8x128xf32>
      %20 = arith.addf %17, %18 : vector<8x128xf32>
      %c0_7 = arith.constant 0 : index
      %c0_8 = arith.constant 0 : index
      %c0_9 = arith.constant 0 : index
      %c0_10 = arith.constant 0 : index
      %21 = vector.load %arg4[%c0_7, %c0_8, %c0_9, %c0_10] : memref<1x2x8x128xf32, #tpu.memory_space<vmem>>, vector<1x1x8x128xf32>
      %22 = vector.shape_cast %21 : vector<1x1x8x128xf32> to vector<8x128xf32>
      %23 = vector.shape_cast %19 : vector<8x128xf32> to vector<1x8x128xf32>
      %cst_11 = arith.constant dense<0.000000e+00> : vector<8x128xf32>
      %24 = vector.multi_reduction <add>, %23, %cst_11 [0] : vector<1x8x128xf32> to vector<8x128xf32>
      %25 = arith.addf %22, %24 : vector<8x128xf32>
      %c0_12 = arith.constant 0 : index
      %c0_13 = arith.constant 0 : index
      %c0_14 = arith.constant 0 : index
      %c0_15 = arith.constant 0 : index
      %26 = vector.load %arg4[%c0_12, %c0_13, %c0_14, %c0_15] : memref<1x2x8x128xf32, #tpu.memory_space<vmem>>, vector<1x1x8x128xf32>
      %27 = vector.shape_cast %26 : vector<1x1x8x128xf32> to vector<8x128xf32>
      %28 = vector.shape_cast %25 : vector<8x128xf32> to vector<1x1x8x128xf32>
      tpu.vector_store %arg4[%c0_12, %c0_13, %c0_14, %c0_15], %28 {strides = array<i32>} : memref<1x2x8x128xf32, #tpu.memory_space<vmem>>, vector<1x1x8x128xf32>,
      %c0_16 = arith.constant 0 : index
      %c1 = arith.constant 1 : index
      %c0_17 = arith.constant 0 : index
      %c0_18 = arith.constant 0 : index
      %29 = vector.load %arg4[%c0_16, %c1, %c0_17, %c0_18] : memref<1x2x8x128xf32, #tpu.memory_space<vmem>>, vector<1x1x8x128xf32>
      %30 = vector.shape_cast %29 : vector<1x1x8x128xf32> to vector<8x128xf32>
      %31 = vector.shape_cast %20 : vector<8x128xf32> to vector<1x8x128xf32>
      %cst_19 = arith.constant dense<0.000000e+00> : vector<8x128xf32>
      %32 = vector.multi_reduction <add>, %31, %cst_19 [0] : vector<1x8x128xf32> to vector<8x128xf32>
      %33 = arith.addf %30, %32 : vector<8x128xf32>
      %c0_20 = arith.constant 0 : index
      %c1_21 = arith.constant 1 : index
      %c0_22 = arith.constant 0 : index
      %c0_23 = arith.constant 0 : index
      %34 = vector.load %arg4[%c0_20, %c1_21, %c0_22, %c0_23] : memref<1x2x8x128xf32, #tpu.memory_space<vmem>>, vector<1x1x8x128xf32>
      %35 = vector.shape_cast %34 : vector<1x1x8x128xf32> to vector<8x128xf32>
      %36 = vector.shape_cast %33 : vector<8x128xf32> to vector<1x1x8x128xf32>
      tpu.vector_store %arg4[%c0_20, %c1_21, %c0_22, %c0_23], %36 {strides = array<i32>} : memref<1x2x8x128xf32, #tpu.memory_space<vmem>>, vector<1x1x8x128xf32>,
    } else {
    }
    %true = arith.constant true
    %10 = arith.xori %7, %true : i1
    %11 = arith.extui %10 : i1 to i32
    %c0_i32_3 = arith.constant 0 : i32
    %12 = arith.cmpi ne, %11, %c0_i32_3 : i32
    scf.if %12 {
      %c0_i32_4 = arith.constant 0 : i32
      %c8_i32_5 = arith.constant 8 : i32
      %13 = arith.maxsi %c0_i32_4, %6 : i32
      %14 = arith.minsi %c8_i32_5, %13 : i32
      %15 = tpu.iota {dimensions = array<i32: 0>} : vector<8x128xi32>
      %16 = vector.broadcast %14 : i32 to vector<8x128xi32>
      %17 = arith.cmpi slt, %15, %16 : vector<8x128xi32>
      %c0 = arith.constant 0 : index
      %c0_6 = arith.constant 0 : index
      %18 = vector.load %arg2[%c0, %c0_6] : memref<8x128xf32, #tpu.memory_space<vmem>>, vector<8x128xf32>
      %cst = arith.constant 0.000000e+00 : f32
      %19 = vector.broadcast %cst : f32 to vector<8x128xf32>
      %20 = arith.cmpf ogt, %18, %19 : vector<8x128xf32>
      %21 = arith.extui %20 : vector<8x128xi1> to vector<8x128xi32>
      %22 = arith.sitofp %21 : vector<8x128xi32> to vector<8x128xf32>
      %cst_7 = arith.constant 0.000000e+00 : f32
      %23 = vector.broadcast %cst_7 : f32 to vector<8x128xf32>
      %24 = arith.select %17, %22, %23 : vector<8x128xi1>, vector<8x128xf32>
      %c0_8 = arith.constant 0 : index
      %c0_9 = arith.constant 0 : index
      %25 = vector.load %arg3[%c0_8, %c0_9] : memref<8x128xf32, #tpu.memory_space<vmem>>, vector<8x128xf32>
      %cst_10 = arith.constant 0.000000e+00 : f32
      %26 = vector.broadcast %cst_10 : f32 to vector<8x128xf32>
      %27 = arith.select %17, %25, %26 : vector<8x128xi1>, vector<8x128xf32>
      %28 = arith.mulf %24, %27 : vector<8x128xf32>
      %29 = arith.addf %24, %27 : vector<8x128xf32>
      %c0_11 = arith.constant 0 : index
      %c0_12 = arith.constant 0 : index
      %c0_13 = arith.constant 0 : index
      %c0_14 = arith.constant 0 : index
      %30 = vector.load %arg4[%c0_11, %c0_12, %c0_13, %c0_14] : memref<1x2x8x128xf32, #tpu.memory_space<vmem>>, vector<1x1x8x128xf32>
      %31 = vector.shape_cast %30 : vector<1x1x8x128xf32> to vector<8x128xf32>
      %32 = vector.shape_cast %28 : vector<8x128xf32> to vector<1x8x128xf32>
      %cst_15 = arith.constant dense<0.000000e+00> : vector<8x128xf32>
      %33 = vector.multi_reduction <add>, %32, %cst_15 [0] : vector<1x8x128xf32> to vector<8x128xf32>
      %34 = arith.addf %31, %33 : vector<8x128xf32>
      %c0_16 = arith.constant 0 : index
      %c0_17 = arith.constant 0 : index
      %c0_18 = arith.constant 0 : index
      %c0_19 = arith.constant 0 : index
      %35 = vector.load %arg4[%c0_16, %c0_17, %c0_18, %c0_19] : memref<1x2x8x128xf32, #tpu.memory_space<vmem>>, vector<1x1x8x128xf32>
      %36 = vector.shape_cast %35 : vector<1x1x8x128xf32> to vector<8x128xf32>
      %37 = vector.shape_cast %34 : vector<8x128xf32> to vector<1x1x8x128xf32>
      tpu.vector_store %arg4[%c0_16, %c0_17, %c0_18, %c0_19], %37 {strides = array<i32>} : memref<1x2x8x128xf32, #tpu.memory_space<vmem>>, vector<1x1x8x128xf32>,
      %c0_20 = arith.constant 0 : index
      %c1 = arith.constant 1 : index
      %c0_21 = arith.constant 0 : index
      %c0_22 = arith.constant 0 : index
      %38 = vector.load %arg4[%c0_20, %c1, %c0_21, %c0_22] : memref<1x2x8x128xf32, #tpu.memory_space<vmem>>, vector<1x1x8x128xf32>
      %39 = vector.shape_cast %38 : vector<1x1x8x128xf32> to vector<8x128xf32>
      %40 = vector.shape_cast %29 : vector<8x128xf32> to vector<1x8x128xf32>
      %cst_23 = arith.constant dense<0.000000e+00> : vector<8x128xf32>
      %41 = vector.multi_reduction <add>, %40, %cst_23 [0] : vector<1x8x128xf32> to vector<8x128xf32>
      %42 = arith.addf %39, %41 : vector<8x128xf32>
      %c0_24 = arith.constant 0 : index
      %c1_25 = arith.constant 1 : index
      %c0_26 = arith.constant 0 : index
      %c0_27 = arith.constant 0 : index
      %43 = vector.load %arg4[%c0_24, %c1_25, %c0_26, %c0_27] : memref<1x2x8x128xf32, #tpu.memory_space<vmem>>, vector<1x1x8x128xf32>
      %44 = vector.shape_cast %43 : vector<1x1x8x128xf32> to vector<8x128xf32>
      %45 = vector.shape_cast %42 : vector<8x128xf32> to vector<1x1x8x128xf32>
      tpu.vector_store %arg4[%c0_24, %c1_25, %c0_26, %c0_27], %45 {strides = array<i32>} : memref<1x2x8x128xf32, #tpu.memory_space<vmem>>, vector<1x1x8x128xf32>,
    } else {
    }
    return
  }
  func.func @transform_0(%arg0: i32, %arg1: i32) -> (i32, i32) {
    %c1_i32 = arith.constant 1 : i32
    %0 = arith.muli %arg0, %c1_i32 : i32
    %1 = arith.addi %0, %arg1 : i32
    %c1_i32_0 = arith.constant 1 : i32
    %2 = arith.minsi %1, %c1_i32_0 : i32
    %c0_i32 = arith.constant 0 : i32
    %c0_i32_1 = arith.constant 0 : i32
    return %2, %c0_i32 : i32, i32
  }
  func.func @transform_1(%arg0: i32, %arg1: i32) -> (i32, i32) {
    %c1_i32 = arith.constant 1 : i32
    %0 = arith.muli %arg0, %c1_i32 : i32
    %1 = arith.addi %0, %arg1 : i32
    %c1_i32_0 = arith.constant 1 : i32
    %2 = arith.minsi %1, %c1_i32_0 : i32
    %c0_i32 = arith.constant 0 : i32
    %c0_i32_1 = arith.constant 0 : i32
    return %2, %c0_i32 : i32, i32
  }
  func.func @transform_2(%arg0: i32, %arg1: i32) -> (i32, i32, i32, i32) {
    %c0_i32 = arith.constant 0 : i32
    %c0_i32_0 = arith.constant 0 : i32
    %c0_i32_1 = arith.constant 0 : i32
    %c0_i32_2 = arith.constant 0 : i32
    return %arg0, %c0_i32, %c0_i32_0, %c0_i32_1 : i32, i32, i32, i32
  }
}

</mosaic_0001>

<llo_original>
// kernel: tpu_custom_call.1
$region0: #{tpu_custom_call.1}
  #allocation0 [shape = 'u32[]', space=smem, size = 0x4, offset = 0x4, fixed_abs, tag = 'smem constant byte address 0x4 - core index']
  #allocation1 [shape = 'u32[144,128]{1,0:T(1,128)}', space=vmem, size = 0x12000, scoped, tag = 'internal scratch']
  %s0 = inlined_call_operand.hbm [shape: f32[16,128], index: 0, kind: input, shape index: {}]
  %s1 = inlined_call_operand.hbm [shape: f32[16,128], index: 1, kind: input, shape index: {}]
  %s2 = inlined_call_operand.hbm [shape: f32[2,2,8,128], index: 2, kind: output, shape index: {}]
  %s3 = sld [smem:[#allocation0]]
  $region61: #{tpu_custom_call.1} parent=0
    _
  %s5 = ssub.s32 1, %s3
  %s6 = scalar_select 0, %s5, %s3
  $region1: #{tpu_custom_call.1} parent=0
    #allocation2 [shape = 'u8[8192]{0}', space=vmem, size = 0x2000, scoped, tag = 'input window, operand 0']
    #allocation3 [shape = 's32[2]{0}', space=sflag, size = 0x8, scoped, tag = 'scoped memory for tpu_custom_call.1']
    #allocation4 [shape = 's32[2]{0}', space=sflag, size = 0x8, scoped, tag = 'scoped memory for tpu_custom_call.1']
    #allocation5 [shape = 'u8[8192]{0}', space=vmem, size = 0x2000, scoped, tag = 'input window, operand 1']
    #allocation6 [shape = 's32[2]{0}', space=sflag, size = 0x8, scoped, tag = 'scoped memory for tpu_custom_call.1']
    #allocation7 [shape = 'u8[16384]{0}', space=vmem, size = 0x4000, scoped, tag = 'output window, operand 0']
    %7 = vsyncpa [#allocation3], 0
    %s8 = scalar_lea.sflag [#allocation3], 1
    %9 = vsyncpa %s8, 0
    %10 = vsyncpa [#allocation6], 0
    %s11 = scalar_lea.sflag [#allocation6], 1
    %12 = vsyncpa %s11, 0
    %13 = vsyncpa [#allocation4], 0
    %s14 = scalar_lea.sflag [#allocation4], 1
    %15 = vsyncpa %s14, 0
    loop: start=0, step=1, limit=4
    $region2: #{tpu_custom_call.1} parent=1 // loop_pre_header
      _
    $region3: #{tpu_custom_call.1} parent=1 // loop_header
      %s17 = sphi 0, %s21
      %p18 = scmp.ge.s32.totalorder %s17, 4
      %s24 = sphi 0, %s36
      %s25 = sphi 0, %s32
      %s26 = sphi 0, %s24
      %s27 = sphi 0, %s25
      %s28 = sphi 0, %s26
      %s29 = sphi 0, %s27
      %s45 = sphi 0, %s47
      %s48 = sphi 0, %s45
      %s49 = sphi 0, %s48
      %s65 = sphi 0, %s49
      %s77 = sphi 0, %s79
      %s80 = sphi 0, %s77
      %s81 = sphi 0, %s80
      %s97 = sphi 0, %s81
      %s103 = sphi 0, %s105
      %s106 = sphi 0, %s103
      %s107 = sphi 0, %s106
      %s123 = sphi 0, %s107
    $region4: #{tpu_custom_call.1} parent=1 // loop_header_branch
      %20 = sbr.rel (%p18) target = $region8
    $region5: #{tpu_custom_call.1} parent=1 // loop_body
      %s22 = ssub.s32 %s17, 1
      %s23 = ssub.s32 %s17, 2
      %s30 = sadd.s32 1, %s25
      %p31 = scmp.ge.s32.totalorder %s30, 1
      %s32 = scalar_select %p31, 0, %s30
      %s33 = sadd.s32 1, %s24
      %s34 = scalar_select %p31, %s33, %s24
      %p35 = scmp.ge.s32.totalorder %s34, 2
      %s36 = scalar_select %p35, 0, %s34
      %s37 = sadd.s32 %s24, %s25
      %p38 = scmp.lt.s32.totalorder %s37, 1
      %s39 = scalar_select %p38, %s37, 1
      %s40 = sadd.s32 %s36, %s32
      %p41 = scmp.lt.s32.totalorder %s40, 1
      %s42 = scalar_select %p41, %s40, 1
      %s43 = ssub.s32 %s39, %s42
      %p44 = scmp.eq.s32.totalorder %s43, 0
      %s46 = sadd.s32 %s45, 1
      %s47 = scalar_select %p44, %s45, %s46
      %p50 = pneg %p44
      %p51 = scmp.eq.s32.totalorder %s17, 1
      %p52 = por %p50, %p51
      %p53 = scmp.ne.s32.totalorder %s45, %s48
      %p54 = scmp.eq.s32.totalorder %s17, 0
      %p55 = por %p53, %p54
      %p56 = scmp.ne.s32.totalorder %s45, %s48
      %p57 = scmp.eq.s32.totalorder %s22, 1
      %p58 = por %p56, %p57
      %p59 = scmp.ne.s32.totalorder %s48, %s49
      %p60 = scmp.eq.s32.totalorder %s22, 0
      %p61 = por %p59, %p60
      %p62 = scmp.ne.s32.totalorder %s48, %s49
      %p63 = scmp.eq.s32.totalorder %s23, 1
      %p64 = por %p62, %p63
      %p66 = scmp.ne.s32.totalorder %s49, %s65
      %p67 = scmp.eq.s32.totalorder %s23, 0
      %p68 = por %p66, %p67
      %s69 = sadd.s32 %s24, %s25
      %p70 = scmp.lt.s32.totalorder %s69, 1
      %s71 = scalar_select %p70, %s69, 1
      %s72 = sadd.s32 %s36, %s32
      %p73 = scmp.lt.s32.totalorder %s72, 1
      %s74 = scalar_select %p73, %s72, 1
      %s75 = ssub.s32 %s71, %s74
      %p76 = scmp.eq.s32.totalorder %s75, 0
      %s78 = sadd.s32 %s77, 1
      %s79 = scalar_select %p76, %s77, %s78
      %p82 = pneg %p76
      %p83 = scmp.eq.s32.totalorder %s17, 1
      %p84 = por %p82, %p83
      %p85 = scmp.ne.s32.totalorder %s77, %s80
      %p86 = scmp.eq.s32.totalorder %s17, 0
      %p87 = por %p85, %p86
      %p88 = scmp.ne.s32.totalorder %s77, %s80
      %p89 = scmp.eq.s32.totalorder %s22, 1
      %p90 = por %p88, %p89
      %p91 = scmp.ne.s32.totalorder %s80, %s81
      %p92 = scmp.eq.s32.totalorder %s22, 0
      %p93 = por %p91, %p92
      %p94 = scmp.ne.s32.totalorder %s80, %s81
      %p95 = scmp.eq.s32.totalorder %s23, 1
      %p96 = por %p94, %p95
      %p98 = scmp.ne.s32.totalorder %s81, %s97
      %p99 = scmp.eq.s32.totalorder %s23, 0
      %p100 = por %p98, %p99
      %s101 = ssub.s32 %s24, %s36
      %p102 = scmp.eq.s32.totalorder %s101, 0
      %s104 = sadd.s32 %s103, 1
      %s105 = scalar_select %p102, %s103, %s104
      %p108 = pneg %p102
      %p109 = scmp.eq.s32.totalorder %s17, 1
      %p110 = por %p108, %p109
      %p111 = scmp.ne.s32.totalorder %s103, %s106
      %p112 = scmp.eq.s32.totalorder %s17, 0
      %p113 = por %p111, %p112
      %p114 = scmp.ne.s32.totalorder %s103, %s106
      %p115 = scmp.eq.s32.totalorder %s22, 1
      %p116 = por %p114, %p115
      %p117 = scmp.ne.s32.totalorder %s106, %s107
      %p118 = scmp.eq.s32.totalorder %s22, 0
      %p119 = por %p117, %p118
      %p120 = scmp.ne.s32.totalorder %s106, %s107
      %p121 = scmp.eq.s32.totalorder %s23, 1
      %p122 = por %p120, %p121
      %p124 = scmp.ne.s32.totalorder %s107, %s123
      %p125 = scmp.eq.s32.totalorder %s23, 0
      %p126 = por %p124, %p125
      %p127 = scmp.le.s32.totalorder 1, %s17
      %p128 = scmp.lt.s32.totalorder %s17, 3
      %p129 = pnand %p127, %p128
      %p130 = pneg %p129
      // Predicated region
      $region9: #{tpu_custom_call.1} parent=5 // pred_check
        _
      $region10: #{tpu_custom_call.1} parent=5 // pred_check_branch
        %132 = sbr.rel (%p129) target = $region12
      $region11: #{tpu_custom_call.1} parent=5 // pred_region
        %s133 = ssub.s32 %s17, 1
      $region12: #{tpu_custom_call.1} parent=5 // pred_fallthru
        _
      %p134 = scmp.lt.s32.totalorder %s17, 2
      // Predicated region
      $region13: #{tpu_custom_call.1} parent=5 // pred_check
        %p135 = pneg %p134
      $region14: #{tpu_custom_call.1} parent=5 // pred_check_branch
        %137 = sbr.rel (%p135) target = $region16
      $region15: #{tpu_custom_call.1} parent=5 // pred_region
        // Predicated region
        $region17: #{tpu_custom_call.1} parent=15 // pred_check
          %p138 = pneg %p55
        $region18: #{tpu_custom_call.1} parent=15 // pred_check_branch
          %140 = sbr.rel (%p138) target = $region20
        $region19: #{tpu_custom_call.1} parent=15 // pred_region
          %s141 = sand.u32 %s45, 1
          %s142 = scalar_lea.sflag [#allocation3], %s141
          %s143 = sand.u32 %s45, 1
          %s144 = smul.addr %s143, 8
          %s145 = scalar_lea.vmem [#allocation2], %s144
          %s146 = sadd.s32 %s24, %s25
          %p147 = scmp.lt.s32.totalorder %s146, 1
          %s148 = scalar_select %p147, %s146, 1
          %s150 = ssub.s32 128, 128
          %151 = vsyncadd %s142, %s150
          %s152 = smul.addr %s148, 128
          %s153 = scalar_lea.hbm %s0, %s152
          %s155 = sshll.u32 %s145, 4
          %s156 = int_to_ptr.vmem [resolvable:$true] %s155
          %158 = dma.hbm_to_vmem [thread:$0]  %s153, 128, %s156, %s142
        $region20: #{tpu_custom_call.1} parent=15 // pred_fallthru
          _
        // Predicated region
        $region21: #{tpu_custom_call.1} parent=15 // pred_check
          %p159 = pneg %p87
        $region22: #{tpu_custom_call.1} parent=15 // pred_check_branch
          %161 = sbr.rel (%p159) target = $region24
        $region23: #{tpu_custom_call.1} parent=15 // pred_region
          %s162 = sand.u32 %s77, 1
          %s163 = scalar_lea.sflag [#allocation6], %s162
          %s164 = sand.u32 %s77, 1
          %s165 = smul.addr %s164, 8
          %s166 = scalar_lea.vmem [#allocation5], %s165
          %s167 = sadd.s32 %s24, %s25
          %p168 = scmp.lt.s32.totalorder %s167, 1
          %s169 = scalar_select %p168, %s167, 1
          %s171 = ssub.s32 128, 128
          %172 = vsyncadd %s163, %s171
          %s173 = smul.addr %s169, 128
          %s174 = scalar_lea.hbm %s1, %s173
          %s176 = sshll.u32 %s166, 4
          %s177 = int_to_ptr.vmem [resolvable:$true] %s176
          %179 = dma.hbm_to_vmem [thread:$0]  %s174, 128, %s177, %s163
        $region24: #{tpu_custom_call.1} parent=15 // pred_fallthru
          _
      $region16: #{tpu_custom_call.1} parent=5 // pred_fallthru
        _
      %p180 = scmp.le.s32.totalorder 1, %s17
      %p181 = scmp.lt.s32.totalorder %s17, 3
      %p182 = pnand %p180, %p181
      %p183 = pneg %p182
      // Predicated region
      $region25: #{tpu_custom_call.1} parent=5 // pred_check
        _
      $region26: #{tpu_custom_call.1} parent=5 // pred_check_branch
        %185 = sbr.rel (%p182) target = $region28
      $region27: #{tpu_custom_call.1} parent=5 // pred_region
        %s186 = ssub.s32 %s17, 1
        %s187 = sand.u32 %s48, 1
        %s188 = scalar_lea.sflag [#allocation3], %s187
        %s189 = sand.u32 %s48, 1
        %s190 = smul.addr %s189, 8
        %s191 = scalar_lea.vmem [#allocation2], %s190
        // Predicated region
        $region29: #{tpu_custom_call.1} parent=27 // pred_check
          %p192 = pneg %p61
        $region30: #{tpu_custom_call.1} parent=27 // pred_check_branch
          %194 = sbr.rel (%p192) target = $region32
        $region31: #{tpu_custom_call.1} parent=27 // pred_region
          %195 = dma.done %s188, 128
        $region32: #{tpu_custom_call.1} parent=27 // pred_fallthru
          _
        %s196 = sand.u32 %s80, 1
        %s197 = scalar_lea.sflag [#allocation6], %s196
        %s198 = sand.u32 %s80, 1
        %s199 = smul.addr %s198, 8
        %s200 = scalar_lea.vmem [#allocation5], %s199
        // Predicated region
        $region33: #{tpu_custom_call.1} parent=27 // pred_check
          %p201 = pneg %p93
        $region34: #{tpu_custom_call.1} parent=27 // pred_check_branch
          %203 = sbr.rel (%p201) target = $region36
        $region35: #{tpu_custom_call.1} parent=27 // pred_region
          %204 = dma.done %s197, 128
        $region36: #{tpu_custom_call.1} parent=27 // pred_fallthru
          _
        %s205 = sand.u32 %s48, 1
        %s206 = scalar_lea.sflag [#allocation3], %s205
        %s207 = sand.u32 %s48, 1
        %s208 = smul.addr %s207, 8
        %s209 = scalar_lea.vmem [#allocation2], %s208
        %p210 = pneg %p61
        %p211 = pneg %p58
        %s212 = sand.u32 %s80, 1
        %s213 = scalar_lea.sflag [#allocation6], %s212
        %s214 = sand.u32 %s80, 1
        %s215 = smul.addr %s214, 8
        %s216 = scalar_lea.vmem [#allocation5], %s215
        %p217 = pneg %p93
        %p218 = pneg %p90
        %p219 = pneg %p119
        %p220 = pneg %p116
        %s221 = sand.u32 %s106, 1
        %s222 = scalar_lea.sflag [#allocation4], %s221
        %s223 = sand.u32 %s106, 1
        %s224 = smul.addr %s223, 16
        %s225 = scalar_lea.vmem [#allocation7], %s224
        %s226 = sadd.s32 %s26, %s27
        %p227 = scmp.lt.s32.totalorder %s226, 1
        %s228 = scalar_select %p227, %s226, 1
        %s229 = sadd.s32 %s26, %s27
        %p230 = scmp.lt.s32.totalorder %s229, 1
        %s231 = scalar_select %p230, %s229, 1
        %p232 = scmp.eq.s32.totalorder %s27, 0
        // Predicated region
        $region37: #{tpu_custom_call.1} parent=27 // pred_check
          %p233 = pneg %p232
        $region38: #{tpu_custom_call.1} parent=27 // pred_check_branch
          %235 = sbr.rel (%p233) target = $region40
        $region39: #{tpu_custom_call.1} parent=27 // pred_region
          %236 = vst [vmem:[%s225] sm:$0xff] 0.0
          %237 = vst [vmem:[%s225 + $0x8] sm:$0xff] 0.0
        $region40: #{tpu_custom_call.1} parent=27 // pred_fallthru
          _
        %s238 = sadd.s32 %s26, %s27
        %s239 = smul.u32 %s238, 8
        %s240 = ssub.s32 16, %s239
        %p241 = scmp.ge.s32.totalorder %s240, 8
        // Predicated region
        $region41: #{tpu_custom_call.1} parent=27 // pred_check
          %p242 = pneg %p241
        $region42: #{tpu_custom_call.1} parent=27 // pred_check_branch
          %244 = sbr.rel (%p242) target = $region44
        $region43: #{tpu_custom_call.1} parent=27 // pred_region
          %v245 = vld [vmem:[%s191] sm:$0xff]
          %vm246 = vcmp.gt.f32.partialorder %v245, 0.0
          %v247 = vsel %vm246, 1, 0
          %v248 = vcvt.s32.f32 %v247
          %v249 = vld [vmem:[%s200] sm:$0xff]
          %v250 = vmul.f32 %v248, %v249
          %v251 = vadd.f32 %v248, %v249
          %v252 = vld [vmem:[%s225] sm:$0xff]
          %v253 = vadd.f32 %v250, 0.0
          %v254 = vadd.f32 %v252, %v253
          %255 = vst [vmem:[%s225] sm:$0xff] %v254
          %s256 = scalar_lea.vmem %s225, 8 [#allocation7]
          %v257 = vld [vmem:[%s256] sm:$0xff]
          %v258 = vadd.f32 %v251, 0.0
          %v259 = vadd.f32 %v257, %v258
          %260 = vst [vmem:[%s256] sm:$0xff] %v259
        $region44: #{tpu_custom_call.1} parent=27 // pred_fallthru
          _
        %p261 = scmp.lt.s32.totalorder %s240, 8
        // Predicated region
        $region45: #{tpu_custom_call.1} parent=27 // pred_check
          %p262 = pneg %p261
        $region46: #{tpu_custom_call.1} parent=27 // pred_check_branch
          %264 = sbr.rel (%p262) target = $region48
        $region47: #{tpu_custom_call.1} parent=27 // pred_region
          %p265 = scmp.gt.s32.totalorder %s240, 0
          %s266 = scalar_select %p265, %s240, 0
          %p267 = scmp.lt.s32.totalorder %s266, 8
          %s268 = scalar_select %p267, %s266, 8
          %v269 = vlaneseq
          %v270 = vshrl.u32 %v269, 7
          %v271 = vstv %s268
          %vm272 = vcmp.lt.s32.totalorder %v270, %v271
          %v273 = vld [vmem:[%s191] sm:$0xff]
          %vm274 = vcmp.gt.f32.partialorder %v273, 0.0
          %v275 = vsel %vm274, 1, 0
          %v276 = vcvt.s32.f32 %v275
          %v277 = vsel %vm272, %v276, 0.0
          %v278 = vld [vmem:[%s200] sm:$0xff]
          %v279 = vsel %vm272, %v278, 0.0
          %v280 = vmul.f32 %v277, %v279
          %v281 = vadd.f32 %v277, %v279
          %v282 = vld [vmem:[%s225] sm:$0xff]
          %v283 = vadd.f32 %v280, 0.0
          %v284 = vadd.f32 %v282, %v283
          %285 = vst [vmem:[%s225] sm:$0xff] %v284
          %s286 = scalar_lea.vmem %s225, 8 [#allocation7]
          %v287 = vld [vmem:[%s286] sm:$0xff]
          %v288 = vadd.f32 %v281, 0.0
          %v289 = vadd.f32 %v287, %v288
          %290 = vst [vmem:[%s286] sm:$0xff] %v289
        $region48: #{tpu_custom_call.1} parent=27 // pred_fallthru
          _
        %s291 = sand.u32 %s106, 1
        %s292 = scalar_lea.sflag [#allocation4], %s291
        %s293 = sand.u32 %s106, 1
        %s294 = smul.addr %s293, 16
        %s295 = scalar_lea.vmem [#allocation7], %s294
        // Predicated region
        $region49: #{tpu_custom_call.1} parent=27 // pred_check
          %p296 = pneg %p116
        $region50: #{tpu_custom_call.1} parent=27 // pred_check_branch
          %298 = sbr.rel (%p296) target = $region52
        $region51: #{tpu_custom_call.1} parent=27 // pred_region
          %s300 = ssub.s32 256, 256
          %301 = vsyncadd %s292, %s300
          %s302 = smul.addr %s26, 2
          %s303 = smul.addr %s302, 128
          %s304 = scalar_lea.hbm %s2, %s303
          %s305 = sshll.u32 %s295, 4
          %s306 = int_to_ptr.vmem [resolvable:$true] %s305
          %311 = dma.vmem_to_hbm [thread:$0]  %s306, 256, %s304, %s292, 128, 128, 8
        $region52: #{tpu_custom_call.1} parent=27 // pred_fallthru
          _
      $region28: #{tpu_custom_call.1} parent=5 // pred_fallthru
        _
      %p312 = scmp.le.s32.totalorder 2, %s17
      // Predicated region
      $region53: #{tpu_custom_call.1} parent=5 // pred_check
        %p313 = pneg %p312
      $region54: #{tpu_custom_call.1} parent=5 // pred_check_branch
        %315 = sbr.rel (%p313) target = $region56
      $region55: #{tpu_custom_call.1} parent=5 // pred_region
        %s316 = ssub.s32 %s17, 2
        // Predicated region
        $region57: #{tpu_custom_call.1} parent=55 // pred_check
          %p317 = pneg %p122
        $region58: #{tpu_custom_call.1} parent=55 // pred_check_branch
          %319 = sbr.rel (%p317) target = $region60
        $region59: #{tpu_custom_call.1} parent=55 // pred_region
          %s320 = sand.u32 %s107, 1
          %s321 = scalar_lea.sflag [#allocation4], %s320
          %s322 = sand.u32 %s107, 1
          %s323 = smul.addr %s322, 16
          %s324 = scalar_lea.vmem [#allocation7], %s323
          %325 = dma.done %s321, 256
        $region60: #{tpu_custom_call.1} parent=55 // pred_fallthru
          _
      $region56: #{tpu_custom_call.1} parent=5 // pred_fallthru
        _
    $region6: #{tpu_custom_call.1} parent=1 // loop_footer
      %s21 = sadd.s32 1, %s17
    $region7: #{tpu_custom_call.1} parent=1 // loop_footer_branch
      %16 = sbr.rel target = $region3
    $region8: #{tpu_custom_call.1} parent=1 // loop_exit
      _
    %326 = vsyncpa [#allocation3], 1
    %s327 = scalar_lea.sflag [#allocation3], 1
    %328 = vsyncpa %s327, 1
    %329 = vsyncpa [#allocation6], 1
    %s330 = scalar_lea.sflag [#allocation6], 1
    %331 = vsyncpa %s330, 1
    %332 = vsyncpa [#allocation4], 1
    %s333 = scalar_lea.sflag [#allocation4], 1
    %334 = vsyncpa %s333, 1

</llo_original>
